<compile_context>
chip_gen: v7x
topology: tpu7x:2x2x1
jax: 0.10.0
libtpu: 0.0.40
codegen_flags: <defaults>
</compile_context>

<pallas_src>
import functools

import jax
import jax.numpy as jnp
from jax.experimental import pallas as pl
from jax.experimental.pallas import tpu as pltpu

BN_EPS = 1e-5
_HW_TILE_CAP = 1024              # lane-tile size (multiple of 128) when tiling
_VMEM_LIMIT = 32 * 1024 * 1024   # fits v7x (64 MiB phys) as well as v5e/v6e


def _conv_tile(x_refs, w_refs, apply_relu):
    """Optional ReLU + 1x1 conv of one (C_in, TILE) tile per path, summed.

    Each w_ref is (C_out, C_in) with the rows belonging to the *other* path
    zeroed, so summing the per-path matmuls equals the channel-concatenated
    two-path conv.  (The extra zero-row MXU work is free at 1x1-conv
    arithmetic intensity; for very large C_in/C_out one would instead write
    per-path dots into disjoint channel slices.)
    """
    y = None
    for x_ref, w_ref in zip(x_refs, w_refs):
        x = x_ref[0]                                     # (C_in, TILE)
        if apply_relu:
            x = jnp.maximum(x, 0.0)
        t = jnp.dot(w_ref[...], x, preferred_element_type=jnp.float32)
        y = t if y is None else y + t
    return y                                             # (C_out, TILE) f32


def _stats_kernel(*refs, num_paths, apply_relu):
    """Pass 1: accumulate per-channel sum / sum-of-squares of the conv output."""
    x_refs = refs[:num_paths]
    w_refs = refs[num_paths:2 * num_paths]
    sum_ref, sumsq_ref = refs[2 * num_paths:]

    @pl.when(jnp.logical_and(pl.program_id(0) == 0, pl.program_id(1) == 0))
    def _():
        sum_ref[...] = jnp.zeros_like(sum_ref)
        sumsq_ref[...] = jnp.zeros_like(sumsq_ref)

    y = _conv_tile(x_refs, w_refs, apply_relu)
    sum_ref[...] += jnp.sum(y, axis=1, keepdims=True)
    sumsq_ref[...] += jnp.sum(y * y, axis=1, keepdims=True)


def _apply_kernel(*refs, num_paths, apply_relu):
    """Pass 2: recompute the conv tile, apply folded BN (y*scale + shift)."""
    x_refs = refs[:num_paths]
    w_refs = refs[num_paths:2 * num_paths]
    scale_ref, shift_ref, out_ref = refs[2 * num_paths:]
    y = _conv_tile(x_refs, w_refs, apply_relu)
    out_ref[0] = y * scale_ref[...] + shift_ref[...]


def _hw_tiling(hw):
    """Pick a lane-tile size and the (possibly padded) spatial extent."""
    if hw <= _HW_TILE_CAP:
        return hw, hw                       # single full-width block per batch
    tile = _HW_TILE_CAP                     # multiple of 128
    return tile, -(-hw // tile) * tile


def factorized_reduce(x, w_a, w_b, gamma, beta, *, stride):
    """x: (N, C_in, H, W) float32 NCHW.  Returns (N, C_out, Ho, Wo) NCHW."""
    N, C_in, H, W = x.shape

    if stride == 2:
        Ho, Wo = -(-H // 2), -(-W // 2)
        Ca, Cb = w_a.shape[0], w_b.shape[0]
        C_out = Ca + Cb
        # Path A samples even rows/cols; path B samples odd rows/cols (the
        # PyTorch pad(x)[:, :, 1:, 1:] shift), zero-padded at the bottom/right
        # edge only when H or W is odd.  ReLU is applied inside the kernel
        # (it commutes with the subsample and relu(0) == 0).
        xa = x[:, :, ::2, ::2]
        xb = x[:, :, 1::2, 1::2]
        if xb.shape[2] != Ho or xb.shape[3] != Wo:
            xb = jnp.pad(xb, ((0, 0), (0, 0),
                              (0, Ho - xb.shape[2]), (0, Wo - xb.shape[3])))
        x_list = [xa.reshape(N, C_in, Ho * Wo), xb.reshape(N, C_in, Ho * Wo)]
        wa2 = w_a.reshape(Ca, C_in).astype(jnp.float32)
        wb2 = w_b.reshape(Cb, C_in).astype(jnp.float32)
        w_list = [
            jnp.zeros((C_out, C_in), jnp.float32).at[:Ca].set(wa2),
            jnp.zeros((C_out, C_in), jnp.float32).at[Ca:].set(wb2),
        ]
        apply_relu = True
    elif stride == 1:
        Ho, Wo = H, W
        C_out = w_a.shape[0]
        x_list = [x.reshape(N, C_in, Ho * Wo)]
        w_list = [w_a.reshape(C_out, C_in).astype(jnp.float32)]
        apply_relu = False
    else:
        raise ValueError(f"Invalid stride : {stride}")

    HW = Ho * Wo
    tile, hw_pad = _hw_tiling(HW)
    if hw_pad != HW:
        # Zero columns give exactly zero (bias-free) conv output, so the BN
        # sums stay exact as long as we divide by the true pixel count.
        x_list = [jnp.pad(xi, ((0, 0), (0, 0), (0, hw_pad - HW)))
                  for xi in x_list]
    n_hw = hw_pad // tile
    grid = (N, n_hw)
    num_paths = len(x_list)

    x_specs = [pl.BlockSpec((1, C_in, tile), lambda n, j: (n, 0, j))
               for _ in range(num_paths)]
    w_specs = [pl.BlockSpec((C_out, C_in), lambda n, j: (0, 0))
               for _ in range(num_paths)]
    vec_spec = pl.BlockSpec((C_out, 1), lambda n, j: (0, 0))

    # ---- pass 1: per-channel sum / sum-of-squares (resident accumulators) ---
    y_sum, y_sumsq = pl.pallas_call(
        functools.partial(_stats_kernel, num_paths=num_paths,
                          apply_relu=apply_relu),
        grid=grid,
        in_specs=x_specs + w_specs,
        out_specs=(vec_spec, vec_spec),
        out_shape=(jax.ShapeDtypeStruct((C_out, 1), jnp.float32),
                   jax.ShapeDtypeStruct((C_out, 1), jnp.float32)),
        compiler_params=pltpu.CompilerParams(
            dimension_semantics=("arbitrary", "arbitrary"),
            vmem_limit_bytes=_VMEM_LIMIT),
    )(*x_list, *w_list)

    # Fold BN (training-mode batch stats, biased variance) + affine into one
    # per-channel scale/shift, computed once on tiny (C_out, 1) arrays.
    # Note: E[y^2] - E[y]^2 in f32 can lose precision for large-mean channels;
    # acceptable here (conv output is near zero-mean at these scales).
    count = jnp.float32(N * HW)
    mean = y_sum / count
    var = y_sumsq / count - mean * mean
    inv = jax.lax.rsqrt(var + BN_EPS)
    g = gamma.astype(jnp.float32).reshape(C_out, 1)
    b = beta.astype(jnp.float32).reshape(C_out, 1)
    scale = g * inv
    shift = b - mean * scale

    # ---- pass 2: recompute the cheap conv tile, apply y*scale + shift -------
    out = pl.pallas_call(
        functools.partial(_apply_kernel, num_paths=num_paths,
                          apply_relu=apply_relu),
        grid=grid,
        in_specs=x_specs + w_specs + [vec_spec, vec_spec],
        out_specs=pl.BlockSpec((1, C_out, tile), lambda n, j: (n, 0, j)),
        out_shape=jax.ShapeDtypeStruct((N, C_out, hw_pad), jnp.float32),
        compiler_params=pltpu.CompilerParams(
            dimension_semantics=("parallel", "parallel"),
            vmem_limit_bytes=_VMEM_LIMIT),
    )(*x_list, *w_list, scale, shift)

    if hw_pad != HW:
        out = out[:, :, :HW]
    return out.reshape(N, C_out, Ho, Wo)


def _reference(x, w_a, w_b, gamma, beta, stride):
    """Plain-JAX reference mirroring the PyTorch forward (training-mode BN)."""
    if stride == 2:
        xr = jnp.maximum(x, 0.0)
        y = jnp.pad(xr, ((0, 0), (0, 0), (0, 1), (0, 1)))[:, :, 1:, 1:]
        oa = jax.lax.conv_general_dilated(xr, w_a, (2, 2), "VALID")
        ob = jax.lax.conv_general_dilated(y, w_b, (2, 2), "VALID")
        out = jnp.concatenate([oa, ob], axis=1)
    else:
        out = jax.lax.conv_general_dilated(x, w_a, (1, 1), "VALID")
    mean = out.mean(axis=(0, 2, 3), keepdims=True)
    var = jnp.square(out - mean).mean(axis=(0, 2, 3), keepdims=True)
    out = (out - mean) * jax.lax.rsqrt(var + BN_EPS)
    return out * gamma.reshape(1, -1, 1, 1) + beta.reshape(1, -1, 1, 1)


if __name__ == "__main__":
    N, C_in, H, W = 2, 4, 16, 16
    C_out = 8

    key = jax.random.PRNGKey(0)
    k_x, k_a, k_b, k_c = jax.random.split(key, 4)
    x = jax.random.normal(k_x, (N, C_in, H, W), jnp.float32)

    # Module parameter shapes: convs[0]: (C_out//2, C_in, 1, 1),
    # convs[1]: (C_out - C_out//2, C_in, 1, 1); BN affine (C_out,).
    Ca, Cb = C_out // 2, C_out - C_out // 2
    w_a = 0.1 * jax.random.normal(k_a, (Ca, C_in, 1, 1), jnp.float32)
    w_b = 0.1 * jax.random.normal(k_b, (Cb, C_in, 1, 1), jnp.float32)
    gamma = jnp.linspace(0.5, 1.5, C_out, dtype=jnp.float32)
    beta = jnp.linspace(-0.2, 0.3, C_out, dtype=jnp.float32)

    # stride == 2 (the factorized reduce itself)
    out2 = jax.block_until_ready(
        factorized_reduce(x, w_a, w_b, gamma, beta, stride=2))
    ref2 = _reference(x, w_a, w_b, gamma, beta, 2)
    assert out2.shape == (N, C_out, (H + 1) // 2, (W + 1) // 2), out2.shape
    assert jnp.allclose(out2, ref2, atol=1e-4, rtol=1e-4), "stride-2 mismatch"

    # stride == 1 (single 1x1 conv + BN, no relu)
    w_s1 = 0.1 * jax.random.normal(k_c, (C_out, C_in, 1, 1), jnp.float32)
    out1 = jax.block_until_ready(
        factorized_reduce(x, w_s1, None, gamma, beta, stride=1))
    ref1 = _reference(x, w_s1, None, gamma, beta, 1)
    assert out1.shape == (N, C_out, H, W), out1.shape
    assert jnp.allclose(out1, ref1, atol=1e-4, rtol=1e-4), "stride-1 mismatch"

    print("KERNEL_OK")
</pallas_src>

<mosaic_0001>
module attributes {stable_mosaic.version = 11 : i64} {
  func.func @_stats_kernel(%arg0: i32, %arg1: i32, %arg2: memref<1x4x64xf32, #tpu.memory_space<vmem>>, %arg3: memref<1x4x64xf32, #tpu.memory_space<vmem>>, %arg4: memref<8x4xf32, #tpu.memory_space<vmem>>, %arg5: memref<8x4xf32, #tpu.memory_space<vmem>>, %arg6: memref<8x1xf32, #tpu.memory_space<vmem>>, %arg7: memref<8x1xf32, #tpu.memory_space<vmem>>) attributes {dimension_semantics = [#tpu.dimension_semantics<arbitrary>, #tpu.dimension_semantics<arbitrary>], iteration_bounds = array<i64: 2, 1>, scalar_prefetch = 0 : i64, scratch_operands = 0 : i64, tpu.core_type = #tpu.core_type<tc>, window_params = [{transform_indices = @transform_0, window_bounds = array<i64: 1, 4, 64>}, {transform_indices = @transform_1, window_bounds = array<i64: 1, 4, 64>}, {pipeline_mode = #tpu.pipeline_mode<synchronous>, transform_indices = @transform_2, window_bounds = array<i64: 8, 4>}, {pipeline_mode = #tpu.pipeline_mode<synchronous>, transform_indices = @transform_3, window_bounds = array<i64: 8, 4>}, {pipeline_mode = #tpu.pipeline_mode<synchronous>, transform_indices = @transform_4, window_bounds = array<i64: 8, 1>}, {pipeline_mode = #tpu.pipeline_mode<synchronous>, transform_indices = @transform_5, window_bounds = array<i64: 8, 1>}]} {
    %c0_i32 = arith.constant 0 : i32
    %0 = arith.cmpi eq, %arg0, %c0_i32 : i32
    %c0_i32_0 = arith.constant 0 : i32
    %1 = arith.cmpi eq, %arg1, %c0_i32_0 : i32
    %2 = arith.andi %0, %1 : i1
    %3 = arith.extui %2 : i1 to i32
    %c0_i32_1 = arith.constant 0 : i32
    %4 = arith.cmpi ne, %3, %c0_i32_1 : i32
    scf.if %4 {
      %cst_24 = arith.constant 0.000000e+00 : f32
      %29 = vector.broadcast %cst_24 : f32 to vector<8x1xf32>
      %c0_25 = arith.constant 0 : index
      %c0_26 = arith.constant 0 : index
      %30 = vector.load %arg6[%c0_25, %c0_26] : memref<8x1xf32, #tpu.memory_space<vmem>>, vector<8x1xf32>
      tpu.vector_store %arg6[%c0_25, %c0_26], %29 {strides = array<i32>} : memref<8x1xf32, #tpu.memory_space<vmem>>, vector<8x1xf32>,
      %cst_27 = arith.constant 0.000000e+00 : f32
      %31 = vector.broadcast %cst_27 : f32 to vector<8x1xf32>
      %c0_28 = arith.constant 0 : index
      %c0_29 = arith.constant 0 : index
      %32 = vector.load %arg7[%c0_28, %c0_29] : memref<8x1xf32, #tpu.memory_space<vmem>>, vector<8x1xf32>
      tpu.vector_store %arg7[%c0_28, %c0_29], %31 {strides = array<i32>} : memref<8x1xf32, #tpu.memory_space<vmem>>, vector<8x1xf32>,
    } else {
    }
    %c0 = arith.constant 0 : index
    %c0_2 = arith.constant 0 : index
    %c0_3 = arith.constant 0 : index
    %5 = vector.load %arg2[%c0, %c0_2, %c0_3] : memref<1x4x64xf32, #tpu.memory_space<vmem>>, vector<1x4x64xf32>
    %6 = vector.shape_cast %5 : vector<1x4x64xf32> to vector<4x64xf32>
    %cst = arith.constant 0.000000e+00 : f32
    %7 = vector.broadcast %cst : f32 to vector<4x64xf32>
    %8 = arith.maximumf %6, %7 : vector<4x64xf32>
    %c0_4 = arith.constant 0 : index
    %c0_5 = arith.constant 0 : index
    %9 = vector.load %arg4[%c0_4, %c0_5] : memref<8x4xf32, #tpu.memory_space<vmem>>, vector<8x4xf32>
    %cst_6 = arith.constant dense<0.000000e+00> : vector<8x64xf32>
    %10 = tpu.matmul %9, %8, %cst_6 {dimension_numbers = #tpu.dot_dimension_numbers<[1], [0], [0], [1], [0, 0, 1, 1], [], []>} : vector<8x4xf32>, vector<4x64xf32>, vector<8x64xf32> -> vector<8x64xf32>
    %c0_7 = arith.constant 0 : index
    %c0_8 = arith.constant 0 : index
    %c0_9 = arith.constant 0 : index
    %11 = vector.load %arg3[%c0_7, %c0_8, %c0_9] : memref<1x4x64xf32, #tpu.memory_space<vmem>>, vector<1x4x64xf32>
    %12 = vector.shape_cast %11 : vector<1x4x64xf32> to vector<4x64xf32>
    %cst_10 = arith.constant 0.000000e+00 : f32
    %13 = vector.broadcast %cst_10 : f32 to vector<4x64xf32>
    %14 = arith.maximumf %12, %13 : vector<4x64xf32>
    %c0_11 = arith.constant 0 : index
    %c0_12 = arith.constant 0 : index
    %15 = vector.load %arg5[%c0_11, %c0_12] : memref<8x4xf32, #tpu.memory_space<vmem>>, vector<8x4xf32>
    %cst_13 = arith.constant dense<0.000000e+00> : vector<8x64xf32>
    %16 = tpu.matmul %15, %14, %cst_13 {dimension_numbers = #tpu.dot_dimension_numbers<[1], [0], [0], [1], [0, 0, 1, 1], [], []>} : vector<8x4xf32>, vector<4x64xf32>, vector<8x64xf32> -> vector<8x64xf32>
    %17 = arith.addf %10, %16 : vector<8x64xf32>
    %c0_14 = arith.constant 0 : index
    %c0_15 = arith.constant 0 : index
    %18 = vector.load %arg6[%c0_14, %c0_15] : memref<8x1xf32, #tpu.memory_space<vmem>>, vector<8x1xf32>
    %cst_16 = arith.constant dense<0.000000e+00> : vector<8xf32>
    %19 = vector.multi_reduction <add>, %17, %cst_16 [1] : vector<8x64xf32> to vector<8xf32>
    %20 = vector.shape_cast %19 : vector<8xf32> to vector<8x1xf32>
    %21 = arith.addf %18, %20 : vector<8x1xf32>
    %c0_17 = arith.constant 0 : index
    %c0_18 = arith.constant 0 : index
    %22 = vector.load %arg6[%c0_17, %c0_18] : memref<8x1xf32, #tpu.memory_space<vmem>>, vector<8x1xf32>
    tpu.vector_store %arg6[%c0_17, %c0_18], %21 {strides = array<i32>} : memref<8x1xf32, #tpu.memory_space<vmem>>, vector<8x1xf32>,
    %c0_19 = arith.constant 0 : index
    %c0_20 = arith.constant 0 : index
    %23 = vector.load %arg7[%c0_19, %c0_20] : memref<8x1xf32, #tpu.memory_space<vmem>>, vector<8x1xf32>
    %24 = arith.mulf %17, %17 : vector<8x64xf32>
    %cst_21 = arith.constant dense<0.000000e+00> : vector<8xf32>
    %25 = vector.multi_reduction <add>, %24, %cst_21 [1] : vector<8x64xf32> to vector<8xf32>
    %26 = vector.shape_cast %25 : vector<8xf32> to vector<8x1xf32>
    %27 = arith.addf %23, %26 : vector<8x1xf32>
    %c0_22 = arith.constant 0 : index
    %c0_23 = arith.constant 0 : index
    %28 = vector.load %arg7[%c0_22, %c0_23] : memref<8x1xf32, #tpu.memory_space<vmem>>, vector<8x1xf32>
    tpu.vector_store %arg7[%c0_22, %c0_23], %27 {strides = array<i32>} : memref<8x1xf32, #tpu.memory_space<vmem>>, vector<8x1xf32>,
    return
  }
  func.func @transform_0(%arg0: i32, %arg1: i32) -> (i32, i32, i32) {
    %c0_i32 = arith.constant 0 : i32
    %c0_i32_0 = arith.constant 0 : i32
    return %arg0, %c0_i32, %arg1 : i32, i32, i32
  }
  func.func @transform_1(%arg0: i32, %arg1: i32) -> (i32, i32, i32) {
    %c0_i32 = arith.constant 0 : i32
    %c0_i32_0 = arith.constant 0 : i32
    return %arg0, %c0_i32, %arg1 : i32, i32, i32
  }
  func.func @transform_2(%arg0: i32, %arg1: i32) -> (i32, i32) {
    %c0_i32 = arith.constant 0 : i32
    %c0_i32_0 = arith.constant 0 : i32
    %c0_i32_1 = arith.constant 0 : i32
    return %c0_i32, %c0_i32_0 : i32, i32
  }
  func.func @transform_3(%arg0: i32, %arg1: i32) -> (i32, i32) {
    %c0_i32 = arith.constant 0 : i32
    %c0_i32_0 = arith.constant 0 : i32
    %c0_i32_1 = arith.constant 0 : i32
    return %c0_i32, %c0_i32_0 : i32, i32
  }
  func.func @transform_4(%arg0: i32, %arg1: i32) -> (i32, i32) {
    %c0_i32 = arith.constant 0 : i32
    %c0_i32_0 = arith.constant 0 : i32
    %c0_i32_1 = arith.constant 0 : i32
    return %c0_i32, %c0_i32_0 : i32, i32
  }
  func.func @transform_5(%arg0: i32, %arg1: i32) -> (i32, i32) {
    %c0_i32 = arith.constant 0 : i32
    %c0_i32_0 = arith.constant 0 : i32
    %c0_i32_1 = arith.constant 0 : i32
    return %c0_i32, %c0_i32_0 : i32, i32
  }
}

</mosaic_0001>

<llo_original>
// kernel: tpu_custom_call.1
$region0: #{tpu_custom_call.1}
  #allocation0 [shape = 'u32[]', space=smem, size = 0x4, offset = 0x4, fixed_abs, tag = 'smem constant byte address 0x4 - core index']
  #allocation1 [shape = 'u32[144,128]{1,0:T(1,128)}', space=vmem, size = 0x12000, scoped, tag = 'internal scratch']
  %s0 = inlined_call_operand.vmem [shape: f32[2,4,64], index: 0, kind: input, shape index: {}]
  %s1 = inlined_call_operand.vmem [shape: f32[2,4,64], index: 1, kind: input, shape index: {}]
  %s2 = inlined_call_operand.vmem [shape: f32[8,4], index: 2, kind: input, shape index: {}]
  %s3 = inlined_call_operand.vmem [shape: f32[8,4], index: 3, kind: input, shape index: {}]
  %s4 = inlined_call_operand.vmem [shape: f32[8,1], index: 4, kind: output, shape index: {0}]
  %s5 = inlined_call_operand.vmem [shape: f32[8,1], index: 5, kind: output, shape index: {1}]
  %6 = xla_tuple %s4, %s5
  %s7 = sld [smem:[#allocation0]]
  $region61: #{tpu_custom_call.1} parent=0
    _
  %s9 = ssub.s32 1, %s7
  %s10 = scalar_select 0, %s9, %s7
  loop: start=0, step=1, limit=4
  $region2: #{tpu_custom_call.1} parent=0 // loop_pre_header
    _
  $region3: #{tpu_custom_call.1} parent=0 // loop_header
    %s12 = sphi 0, %s16
    %p13 = scmp.ge.s32.totalorder %s12, 4
    %s19 = sphi 0, %s31
    %s20 = sphi 0, %s27
    %s21 = sphi 0, %s19
    %s22 = sphi 0, %s20
    %s23 = sphi 0, %s21
    %s24 = sphi 0, %s22
    %s36 = sphi 0, %s38
    %s39 = sphi 0, %s36
    %s40 = sphi 0, %s39
    %s56 = sphi 0, %s40
    %s64 = sphi 0, %s66
    %s67 = sphi 0, %s64
    %s68 = sphi 0, %s67
    %s84 = sphi 0, %s68
    %s88 = sphi 0, %s88
    %s90 = sphi 0, %s88
    %s91 = sphi 0, %s90
    %s105 = sphi 0, %s91
    %s109 = sphi 0, %s109
    %s111 = sphi 0, %s109
    %s112 = sphi 0, %s111
    %s126 = sphi 0, %s112
    %s130 = sphi 0, %s130
    %s132 = sphi 0, %s130
    %s133 = sphi 0, %s132
    %s147 = sphi 0, %s133
    %s151 = sphi 0, %s151
    %s153 = sphi 0, %s151
    %s154 = sphi 0, %s153
    %s168 = sphi 0, %s154
  $region4: #{tpu_custom_call.1} parent=0 // loop_header_branch
    %15 = sbr.rel (%p13) target = $region8
  $region5: #{tpu_custom_call.1} parent=0 // loop_body
    %s17 = ssub.s32 %s12, 1
    %s18 = ssub.s32 %s12, 2
    %s25 = sadd.s32 1, %s20
    %p26 = scmp.ge.s32.totalorder %s25, 1
    %s27 = scalar_select %p26, 0, %s25
    %s28 = sadd.s32 1, %s19
    %s29 = scalar_select %p26, %s28, %s19
    %p30 = scmp.ge.s32.totalorder %s29, 2
    %s31 = scalar_select %p30, 0, %s29
    %s32 = ssub.s32 %s19, %s31
    %s33 = ssub.s32 %s20, %s27
    %s34 = sor.u32 %s32, %s33
    %p35 = scmp.eq.s32.totalorder %s34, 0
    %s37 = sadd.s32 %s36, 1
    %s38 = scalar_select %p35, %s36, %s37
    %p41 = pneg %p35
    %p42 = scmp.eq.s32.totalorder %s12, 1
    %p43 = por %p41, %p42
    %p44 = scmp.ne.s32.totalorder %s36, %s39
    %p45 = scmp.eq.s32.totalorder %s12, 0
    %p46 = por %p44, %p45
    %p47 = scmp.ne.s32.totalorder %s36, %s39
    %p48 = scmp.eq.s32.totalorder %s17, 1
    %p49 = por %p47, %p48
    %p50 = scmp.ne.s32.totalorder %s39, %s40
    %p51 = scmp.eq.s32.totalorder %s17, 0
    %p52 = por %p50, %p51
    %p53 = scmp.ne.s32.totalorder %s39, %s40
    %p54 = scmp.eq.s32.totalorder %s18, 1
    %p55 = por %p53, %p54
    %p57 = scmp.ne.s32.totalorder %s40, %s56
    %p58 = scmp.eq.s32.totalorder %s18, 0
    %p59 = por %p57, %p58
    %s60 = ssub.s32 %s19, %s31
    %s61 = ssub.s32 %s20, %s27
    %s62 = sor.u32 %s60, %s61
    %p63 = scmp.eq.s32.totalorder %s62, 0
    %s65 = sadd.s32 %s64, 1
    %s66 = scalar_select %p63, %s64, %s65
    %p69 = pneg %p63
    %p70 = scmp.eq.s32.totalorder %s12, 1
    %p71 = por %p69, %p70
    %p72 = scmp.ne.s32.totalorder %s64, %s67
    %p73 = scmp.eq.s32.totalorder %s12, 0
    %p74 = por %p72, %p73
    %p75 = scmp.ne.s32.totalorder %s64, %s67
    %p76 = scmp.eq.s32.totalorder %s17, 1
    %p77 = por %p75, %p76
    %p78 = scmp.ne.s32.totalorder %s67, %s68
    %p79 = scmp.eq.s32.totalorder %s17, 0
    %p80 = por %p78, %p79
    %p81 = scmp.ne.s32.totalorder %s67, %s68
    %p82 = scmp.eq.s32.totalorder %s18, 1
    %p83 = por %p81, %p82
    %p85 = scmp.ne.s32.totalorder %s68, %s84
    %p86 = scmp.eq.s32.totalorder %s18, 0
    %p87 = por %p85, %p86
    %s89 = sadd.s32 %s88, 1
    %p92 = scmp.eq.s32.totalorder %s12, 1
    %p93 = scmp.ne.s32.totalorder %s88, %s90
    %p94 = scmp.eq.s32.totalorder %s12, 0
    %p95 = por %p93, %p94
    %p96 = scmp.ne.s32.totalorder %s88, %s90
    %p97 = scmp.eq.s32.totalorder %s17, 1
    %p98 = por %p96, %p97
    %p99 = scmp.ne.s32.totalorder %s90, %s91
    %p100 = scmp.eq.s32.totalorder %s17, 0
    %p101 = por %p99, %p100
    %p102 = scmp.ne.s32.totalorder %s90, %s91
    %p103 = scmp.eq.s32.totalorder %s18, 1
    %p104 = por %p102, %p103
    %p106 = scmp.ne.s32.totalorder %s91, %s105
    %p107 = scmp.eq.s32.totalorder %s18, 0
    %p108 = por %p106, %p107
    %s110 = sadd.s32 %s109, 1
    %p113 = scmp.eq.s32.totalorder %s12, 1
    %p114 = scmp.ne.s32.totalorder %s109, %s111
    %p115 = scmp.eq.s32.totalorder %s12, 0
    %p116 = por %p114, %p115
    %p117 = scmp.ne.s32.totalorder %s109, %s111
    %p118 = scmp.eq.s32.totalorder %s17, 1
    %p119 = por %p117, %p118
    %p120 = scmp.ne.s32.totalorder %s111, %s112
    %p121 = scmp.eq.s32.totalorder %s17, 0
    %p122 = por %p120, %p121
    %p123 = scmp.ne.s32.totalorder %s111, %s112
    %p124 = scmp.eq.s32.totalorder %s18, 1
    %p125 = por %p123, %p124
    %p127 = scmp.ne.s32.totalorder %s112, %s126
    %p128 = scmp.eq.s32.totalorder %s18, 0
    %p129 = por %p127, %p128
    %s131 = sadd.s32 %s130, 1
    %p134 = scmp.eq.s32.totalorder %s12, 1
    %p135 = scmp.ne.s32.totalorder %s130, %s132
    %p136 = scmp.eq.s32.totalorder %s12, 0
    %p137 = por %p135, %p136
    %p138 = scmp.ne.s32.totalorder %s130, %s132
    %p139 = scmp.eq.s32.totalorder %s17, 1
    %p140 = por %p138, %p139
    %p141 = scmp.ne.s32.totalorder %s132, %s133
    %p142 = scmp.eq.s32.totalorder %s17, 0
    %p143 = por %p141, %p142
    %p144 = scmp.ne.s32.totalorder %s132, %s133
    %p145 = scmp.eq.s32.totalorder %s18, 1
    %p146 = por %p144, %p145
    %p148 = scmp.ne.s32.totalorder %s133, %s147
    %p149 = scmp.eq.s32.totalorder %s18, 0
    %p150 = por %p148, %p149
    %s152 = sadd.s32 %s151, 1
    %p155 = scmp.eq.s32.totalorder %s12, 1
    %p156 = scmp.ne.s32.totalorder %s151, %s153
    %p157 = scmp.eq.s32.totalorder %s12, 0
    %p158 = por %p156, %p157
    %p159 = scmp.ne.s32.totalorder %s151, %s153
    %p160 = scmp.eq.s32.totalorder %s17, 1
    %p161 = por %p159, %p160
    %p162 = scmp.ne.s32.totalorder %s153, %s154
    %p163 = scmp.eq.s32.totalorder %s17, 0
    %p164 = por %p162, %p163
    %p165 = scmp.ne.s32.totalorder %s153, %s154
    %p166 = scmp.eq.s32.totalorder %s18, 1
    %p167 = por %p165, %p166
    %p169 = scmp.ne.s32.totalorder %s154, %s168
    %p170 = scmp.eq.s32.totalorder %s18, 0
    %p171 = por %p169, %p170
    %p172 = scmp.le.s32.totalorder 1, %s12
    %p173 = scmp.lt.s32.totalorder %s12, 3
    %p174 = pnand %p172, %p173
    %p175 = pneg %p174
    // Predicated region
    $region9: #{tpu_custom_call.1} parent=5 // pred_check
      _
    $region10: #{tpu_custom_call.1} parent=5 // pred_check_branch
      %177 = sbr.rel (%p174) target = $region12
    $region11: #{tpu_custom_call.1} parent=5 // pred_region
      %s178 = ssub.s32 %s12, 1
      // Predicated region
      $region13: #{tpu_custom_call.1} parent=11 // pred_check
        %p179 = pneg %p101
      $region14: #{tpu_custom_call.1} parent=11 // pred_check_branch
        %181 = sbr.rel (%p179) target = $region16
      $region15: #{tpu_custom_call.1} parent=11 // pred_region
        _
      $region16: #{tpu_custom_call.1} parent=11 // pred_fallthru
        _
      // Predicated region
      $region17: #{tpu_custom_call.1} parent=11 // pred_check
        %p182 = pneg %p122
      $region18: #{tpu_custom_call.1} parent=11 // pred_check_branch
        %184 = sbr.rel (%p182) target = $region20
      $region19: #{tpu_custom_call.1} parent=11 // pred_region
        _
      $region20: #{tpu_custom_call.1} parent=11 // pred_fallthru
        _
    $region12: #{tpu_custom_call.1} parent=5 // pred_fallthru
      _
    %p185 = scmp.lt.s32.totalorder %s12, 2
    // Predicated region
    $region21: #{tpu_custom_call.1} parent=5 // pred_check
      %p186 = pneg %p185
    $region22: #{tpu_custom_call.1} parent=5 // pred_check_branch
      %188 = sbr.rel (%p186) target = $region24
    $region23: #{tpu_custom_call.1} parent=5 // pred_region
      // Predicated region
      $region25: #{tpu_custom_call.1} parent=23 // pred_check
        %p189 = pneg %p46
      $region26: #{tpu_custom_call.1} parent=23 // pred_check_branch
        %191 = sbr.rel (%p189) target = $region28
      $region27: #{tpu_custom_call.1} parent=23 // pred_region
        %p192 = scmp.lt.s32.totalorder %s19, 1
        %s193 = scalar_select %p192, %s19, 1
        %p194 = scmp.lt.s32.totalorder %s20, 0
        %s195 = scalar_select %p194, %s20, 0
        %s196 = sadd.s32 %s195, %s193
        %s197 = smul.addr %s196, 4
        %s198 = scalar_lea.vmem %s0, %s197
      $region28: #{tpu_custom_call.1} parent=23 // pred_fallthru
        _
      // Predicated region
      $region29: #{tpu_custom_call.1} parent=23 // pred_check
        %p199 = pneg %p74
      $region30: #{tpu_custom_call.1} parent=23 // pred_check_branch
        %201 = sbr.rel (%p199) target = $region32
      $region31: #{tpu_custom_call.1} parent=23 // pred_region
        %p202 = scmp.lt.s32.totalorder %s19, 1
        %s203 = scalar_select %p202, %s19, 1
        %p204 = scmp.lt.s32.totalorder %s20, 0
        %s205 = scalar_select %p204, %s20, 0
        %s206 = sadd.s32 %s205, %s203
        %s207 = smul.addr %s206, 4
        %s208 = scalar_lea.vmem %s1, %s207
      $region32: #{tpu_custom_call.1} parent=23 // pred_fallthru
        _
    $region24: #{tpu_custom_call.1} parent=5 // pred_fallthru
      _
    %p209 = scmp.le.s32.totalorder 1, %s12
    %p210 = scmp.lt.s32.totalorder %s12, 3
    %p211 = pnand %p209, %p210
    %p212 = pneg %p211
    // Predicated region
    $region33: #{tpu_custom_call.1} parent=5 // pred_check
      _
    $region34: #{tpu_custom_call.1} parent=5 // pred_check_branch
      %214 = sbr.rel (%p211) target = $region36
    $region35: #{tpu_custom_call.1} parent=5 // pred_region
      %s215 = ssub.s32 %s12, 1
      %p216 = scmp.lt.s32.totalorder %s21, 1
      %s217 = scalar_select %p216, %s21, 1
      %p218 = scmp.lt.s32.totalorder %s22, 0
      %s219 = scalar_select %p218, %s22, 0
      %s220 = sadd.s32 %s219, %s217
      %s221 = smul.addr %s220, 4
      %s222 = scalar_lea.vmem %s0, %s221
      %p223 = pneg %p52
      %p224 = pneg %p49
      %p225 = scmp.lt.s32.totalorder %s21, 1
      %s226 = scalar_select %p225, %s21, 1
      %p227 = scmp.lt.s32.totalorder %s22, 0
      %s228 = scalar_select %p227, %s22, 0
      %s229 = sadd.s32 %s228, %s226
      %s230 = smul.addr %s229, 4
      %s231 = scalar_lea.vmem %s1, %s230
      %p232 = pneg %p80
      %p233 = pneg %p77
      %p234 = pneg %p101
      %p235 = pneg %p98
      %p236 = pneg %p122
      %p237 = pneg %p119
      %p238 = pneg %p143
      %p239 = pneg %p140
      %p240 = pneg %p164
      %p241 = pneg %p161
      %p242 = scmp.lt.s32.totalorder %s21, 1
      %s243 = scalar_select %p242, %s21, 1
      %p244 = scmp.lt.s32.totalorder %s22, 0
      %s245 = scalar_select %p244, %s22, 0
      %s246 = sadd.s32 %s245, %s243
      %s247 = smul.addr %s246, 4
      %s248 = scalar_lea.vmem %s0, %s247
      %p249 = scmp.lt.s32.totalorder %s21, 1
      %s250 = scalar_select %p249, %s21, 1
      %p251 = scmp.lt.s32.totalorder %s22, 0
      %s252 = scalar_select %p251, %s22, 0
      %s253 = sadd.s32 %s252, %s250
      %s254 = smul.addr %s253, 4
      %s255 = scalar_lea.vmem %s1, %s254
      %p256 = scmp.eq.s32.totalorder %s21, 0
      %p257 = scmp.eq.s32.totalorder %s22, 0
      %p258 = pnand %p256, %p257
      %p259 = pneg %p258
      // Predicated region
      $region37: #{tpu_custom_call.1} parent=35 // pred_check
        _
      $region38: #{tpu_custom_call.1} parent=35 // pred_check_branch
        %261 = sbr.rel (%p258) target = $region40
      $region39: #{tpu_custom_call.1} parent=35 // pred_region
        %vm262 = vcmask 7168
        %263 = vst.msk [vmem:[%s4] sm:$0xff] %vm262, 0.0
        %264 = vst.msk [vmem:[%s5] sm:$0xff] %vm262, 0.0
      $region40: #{tpu_custom_call.1} parent=35 // pred_fallthru
        _
      %v265 = vld [vmem:[%s248] sm:$0xf]
      %v266 = vmax.f32 %v265, 0.0
      %v267 = vld [vmem:[%s2] sm:$0xff]
      %v268 = vld [vmem:[%s255] sm:$0xf]
      %v269 = vmax.f32 %v268, 0.0
      %v270 = vld [vmem:[%s3] sm:$0xff]
      %vm271 = vcmask 31744
      %v273 = vsel %vm271, %v270, 0
      %vm275 = vcmask 1043456
      %v277 = vsel %vm275, %v269, 0
      %279 = vmatprep.subr.mxu0 0.0
      %280 = vmatpush1.msra.mxu0 %v277
      %281 = vmatprep.subr.mxu0 0.0
      %282 = vmatpush1.msra.mxu0 0.0
      %283 = vmatprep.subr.mxu0 0.0
      %284 = vmatpush1.msra.mxu0 0.0
      %285 = vmatprep.subr.mxu0 0.0
      %286 = vmatpush1.msra.mxu0 0.0
      %287 = vmatprep.subr.mxu0 0.0
      %288 = vmatpush1.msra.mxu0 0.0
      %289 = vmatprep.subr.mxu0 0.0
      %290 = vmatpush1.msra.mxu0 0.0
      %291 = vmatprep.subr.mxu0 0.0
      %292 = vmatpush1.msra.mxu0 0.0
      %293 = vmatprep.subr.mxu0 0.0
      %294 = vmatpush1.msra.mxu0 0.0
      %295 = vmatprep.subr.mxu0 0.0
      %296 = vmatpush1.msra.mxu0 0.0
      %297 = vmatprep.subr.mxu0 0.0
      %298 = vmatpush1.msra.mxu0 0.0
      %299 = vmatprep.subr.mxu0 0.0
      %300 = vmatpush1.msra.mxu0 0.0
      %301 = vmatprep.subr.mxu0 0.0
      %302 = vmatpush1.msra.mxu0 0.0
      %303 = vmatprep.subr.mxu0 0.0
      %304 = vmatpush1.msra.mxu0 0.0
      %305 = vmatprep.subr.mxu0 0.0
      %306 = vmatpush1.msra.mxu0 0.0
      %307 = vmatprep.subr.mxu0 0.0
      %308 = vmatpush1.msra.mxu0 0.0
      %309 = vmatprep.subr.mxu0 0.0
      %310 = vmatpush1.msra.mxu0 0.0
      %311 = vmatprep.subr.mxu0 0.0
      %312 = vmatpush1.msra.mxu0 0.0
      %313 = vmatprep.subr.mxu0 0.0
      %314 = vmatpush1.msra.mxu0 0.0
      %315 = vmatprep.subr.mxu0 0.0
      %316 = vmatpush1.msra.mxu0 0.0
      %317 = vmatprep.subr.mxu0 0.0
      %318 = vmatpush1.msra.mxu0 0.0
      %319 = vmatprep.subr.mxu0 0.0
      %320 = vmatpush1.msra.mxu0 0.0
      %321 = vmatprep.subr.mxu0 0.0
      %322 = vmatpush1.msra.mxu0 0.0
      %323 = vmatprep.subr.mxu0 0.0
      %324 = vmatpush1.msra.mxu0 0.0
      %325 = vmatprep.subr.mxu0 0.0
      %326 = vmatpush1.msra.mxu0 0.0
      %327 = vmatprep.subr.mxu0 0.0
      %328 = vmatpush1.msra.mxu0 0.0
      %329 = vmatprep.subr.mxu0 0.0
      %330 = vmatpush1.msra.mxu0 0.0
      %331 = vmatprep.subr.mxu0 0.0
      %332 = vmatpush1.msra.mxu0 0.0
      %333 = vmatprep.subr.mxu0 0.0
      %334 = vmatpush1.msra.mxu0 0.0
      %335 = vmatprep.subr.mxu0 0.0
      %336 = vmatpush1.msra.mxu0 0.0
      %337 = vmatprep.subr.mxu0 0.0
      %338 = vmatpush1.msra.mxu0 0.0
      %339 = vmatprep.subr.mxu0 0.0
      %340 = vmatpush1.msra.mxu0 0.0
      %341 = vmatprep.subr.mxu0 0.0
      %342 = vmatpush1.msra.mxu0 0.0
      %343 = vmatprep.mubr.f32.mxu0 0.0
      %344 = vmatmul.mubr.f32.gmra.mrb[0].mxu0 %v273
      %v345 = vpop.f32.mrb[0].mxu0
      %v346 = vadd.f32 0.0, %v345
      %v347 = vpop.f32.mrb[0].mxu0
      %348 = vdwg.mxu0
      %v350 = vsel %vm271, %v267, 0
      %v353 = vsel %vm275, %v266, 0
      %355 = vmatprep.subr.mxu0 0.0
      %356 = vmatpush1.msra.mxu0 %v353
      %357 = vmatprep.subr.mxu0 0.0
      %358 = vmatpush1.msra.mxu0 0.0
      %359 = vmatprep.subr.mxu0 0.0
      %360 = vmatpush1.msra.mxu0 0.0
      %361 = vmatprep.subr.mxu0 0.0
      %362 = vmatpush1.msra.mxu0 0.0
      %363 = vmatprep.subr.mxu0 0.0
      %364 = vmatpush1.msra.mxu0 0.0
      %365 = vmatprep.subr.mxu0 0.0
      %366 = vmatpush1.msra.mxu0 0.0
      %367 = vmatprep.subr.mxu0 0.0
      %368 = vmatpush1.msra.mxu0 0.0
      %369 = vmatprep.subr.mxu0 0.0
      %370 = vmatpush1.msra.mxu0 0.0
      %371 = vmatprep.subr.mxu0 0.0
      %372 = vmatpush1.msra.mxu0 0.0
      %373 = vmatprep.subr.mxu0 0.0
      %374 = vmatpush1.msra.mxu0 0.0
      %375 = vmatprep.subr.mxu0 0.0
      %376 = vmatpush1.msra.mxu0 0.0
      %377 = vmatprep.subr.mxu0 0.0
      %378 = vmatpush1.msra.mxu0 0.0
      %379 = vmatprep.subr.mxu0 0.0
      %380 = vmatpush1.msra.mxu0 0.0
      %381 = vmatprep.subr.mxu0 0.0
      %382 = vmatpush1.msra.mxu0 0.0
      %383 = vmatprep.subr.mxu0 0.0
      %384 = vmatpush1.msra.mxu0 0.0
      %385 = vmatprep.subr.mxu0 0.0
      %386 = vmatpush1.msra.mxu0 0.0
      %387 = vmatprep.subr.mxu0 0.0
      %388 = vmatpush1.msra.mxu0 0.0
      %389 = vmatprep.subr.mxu0 0.0
      %390 = vmatpush1.msra.mxu0 0.0
      %391 = vmatprep.subr.mxu0 0.0
      %392 = vmatpush1.msra.mxu0 0.0
      %393 = vmatprep.subr.mxu0 0.0
      %394 = vmatpush1.msra.mxu0 0.0
      %395 = vmatprep.subr.mxu0 0.0
      %396 = vmatpush1.msra.mxu0 0.0
      %397 = vmatprep.subr.mxu0 0.0
      %398 = vmatpush1.msra.mxu0 0.0
      %399 = vmatprep.subr.mxu0 0.0
      %400 = vmatpush1.msra.mxu0 0.0
      %401 = vmatprep.subr.mxu0 0.0
      %402 = vmatpush1.msra.mxu0 0.0
      %403 = vmatprep.subr.mxu0 0.0
      %404 = vmatpush1.msra.mxu0 0.0
      %405 = vmatprep.subr.mxu0 0.0
      %406 = vmatpush1.msra.mxu0 0.0
      %407 = vmatprep.subr.mxu0 0.0
      %408 = vmatpush1.msra.mxu0 0.0
      %409 = vmatprep.subr.mxu0 0.0
      %410 = vmatpush1.msra.mxu0 0.0
      %411 = vmatprep.subr.mxu0 0.0
      %412 = vmatpush1.msra.mxu0 0.0
      %413 = vmatprep.subr.mxu0 0.0
      %414 = vmatpush1.msra.mxu0 0.0
      %415 = vmatprep.subr.mxu0 0.0
      %416 = vmatpush1.msra.mxu0 0.0
      %417 = vmatprep.subr.mxu0 0.0
      %418 = vmatpush1.msra.mxu0 0.0
      %419 = vmatprep.mubr.f32.mxu0 0.0
      %420 = vmatmul.mubr.f32.gmra.mrb[0].mxu0 %v350
      %v421 = vpop.f32.mrb[0].mxu0
      %v422 = vadd.f32 %v346, %v421
      %v423 = vpop.f32.mrb[0].mxu0
      %424 = vdwg.mxu0
      %v425 = vld [vmem:[%s4] sm:$0xff]
      %vm426 = vcmask 523264
      %v427 = vsel %vm426, %v422, 0.0
      %428 = vadd.xlane.f32.xlu0 %v427
      %v429 = vpop.xlane.xlu0 %428
      %v430 = vadd.f32 %v425, %v429
      %vm431 = vcmask 7168
      %432 = vst.msk [vmem:[%s4] sm:$0xff] %vm431, %v430
      %v433 = vld [vmem:[%s5] sm:$0xff]
      %v434 = vmul.f32 %v422, %v422
      %v435 = vsel %vm426, %v434, 0.0
      %436 = vadd.xlane.f32.xlu0 %v435
      %v437 = vpop.xlane.xlu0 %436
      %v438 = vadd.f32 %v433, %v437
      %439 = vst.msk [vmem:[%s5] sm:$0xff] %vm431, %v438
      // Predicated region
      $region41: #{tpu_custom_call.1} parent=35 // pred_check
        %p440 = pneg %p140
      $region42: #{tpu_custom_call.1} parent=35 // pred_check_branch
        %442 = sbr.rel (%p440) target = $region44
      $region43: #{tpu_custom_call.1} parent=35 // pred_region
        _
      $region44: #{tpu_custom_call.1} parent=35 // pred_fallthru
        _
      // Predicated region
      $region45: #{tpu_custom_call.1} parent=35 // pred_check
        %p443 = pneg %p161
      $region46: #{tpu_custom_call.1} parent=35 // pred_check_branch
        %445 = sbr.rel (%p443) target = $region48
      $region47: #{tpu_custom_call.1} parent=35 // pred_region
        _
      $region48: #{tpu_custom_call.1} parent=35 // pred_fallthru
        _
      // Predicated region
      $region49: #{tpu_custom_call.1} parent=35 // pred_check
        %p446 = pneg %p140
      $region50: #{tpu_custom_call.1} parent=35 // pred_check_branch
        %448 = sbr.rel (%p446) target = $region52
      $region51: #{tpu_custom_call.1} parent=35 // pred_region
        _
      $region52: #{tpu_custom_call.1} parent=35 // pred_fallthru
        _
      // Predicated region
      $region53: #{tpu_custom_call.1} parent=35 // pred_check
        %p449 = pneg %p161
      $region54: #{tpu_custom_call.1} parent=35 // pred_check_branch
        %451 = sbr.rel (%p449) target = $region56
      $region55: #{tpu_custom_call.1} parent=35 // pred_region
        _
      $region56: #{tpu_custom_call.1} parent=35 // pred_fallthru
        _
    $region36: #{tpu_custom_call.1} parent=5 // pred_fallthru
      _
    %p452 = scmp.le.s32.totalorder 2, %s12
    // Predicated region
    $region57: #{tpu_custom_call.1} parent=5 // pred_check
      %p453 = pneg %p452
    $region58: #{tpu_custom_call.1} parent=5 // pred_check_branch
      %455 = sbr.rel (%p453) target = $region60
    $region59: #{tpu_custom_call.1} parent=5 // pred_region
      %s456 = ssub.s32 %s12, 2
    $region60: #{tpu_custom_call.1} parent=5 // pred_fallthru
      _
  $region6: #{tpu_custom_call.1} parent=0 // loop_footer
    %s16 = sadd.s32 1, %s12
  $region7: #{tpu_custom_call.1} parent=0 // loop_footer_branch
    %11 = sbr.rel target = $region3
  $region8: #{tpu_custom_call.1} parent=0 // loop_exit
    _

</llo_original>
